<compile_context>
chip_gen: v7x
topology: tpu7x:2x2x1
jax: 0.10.0
libtpu: 0.0.40
codegen_flags: <defaults>
</compile_context>

<pallas_src>
import functools

import jax
import jax.numpy as jnp
import numpy as np
from jax.experimental import pallas as pl
from jax.experimental.pallas import tpu as pltpu

EPS = 1e-5  # PyTorch BatchNorm2d default


def _non_local_kernel(x_ref, p_ref, z_ref, *, C, Bt, hw):
    """Fused non-local block for `Bt` batch elements.

    x_ref : (Bt*C, HW) VMEM   input rows; row b*C + c == (batch b, channel c)
    p_ref : (5*C + 3,) SMEM   packed scalar parameters:
              [0:C)            theta_w
              [C:2C)           phi_w
              [2C:3C)          g_w
              [3C,3C+1,3C+2]   theta_b, phi_b, g_b
              [3C+3:4C+3)      eff_w = gamma/sqrt(var+eps) * W_w      (BN folded)
              [4C+3:5C+3)      eff_b = gamma/sqrt(var+eps)*(W_b-mean) + beta
    z_ref : (Bt*C, HW) VMEM   output = x + BN(W(y))
    """
    inv_n = 1.0 / hw
    tb = p_ref[3 * C]
    pb = p_ref[3 * C + 1]
    gb = p_ref[3 * C + 2]

    for b in range(Bt):                       # static unroll, Bt is tiny
        base = b * C
        # one lane-dense (1, HW) row per channel of this batch element
        rows = [x_ref[base + c: base + c + 1, :] for c in range(C)]

        # theta / phi / g 1x1 convs as scalar-weighted VPU FMAs (no MXU).
        theta = rows[0] * p_ref[0]
        phi = rows[0] * p_ref[C]
        g = rows[0] * p_ref[2 * C]
        for c in range(1, C):
            theta = theta + rows[c] * p_ref[c]
            phi = phi + rows[c] * p_ref[C + c]
            g = g + rows[c] * p_ref[2 * C + c]
        theta = theta + tb
        phi = phi + pb
        g = g + gb

        # ((theta phi^T)/N) @ g collapses exactly (associativity) to
        #   y_p = theta_p * (sum_q phi_q * g_q) / N
        s = jnp.sum(phi * g) * inv_n          # scalar (cross-lane reduce, XLU)
        y = theta * s                         # (1, HW)

        # W (1x1 conv) + folded BatchNorm + residual, fused epilogue.
        for c in range(C):
            z_ref[base + c: base + c + 1, :] = (
                rows[c] + p_ref[3 * C + 3 + c] * y + p_ref[4 * C + 3 + c])


def _pick_bt(B, C, hw, max_block_bytes=2 << 20):
    """Largest batch tile Bt that divides B, keeps the block's sublane dim (Bt*C)
    a multiple of 8 (or the full B*C), and keeps the per-step block under ~2 MiB
    so double-buffered in+out stays inside every generation's scoped-VMEM default."""
    cap = max(1, max_block_bytes // (C * hw * 4))
    for bt in range(min(B, cap), 0, -1):
        if B % bt == 0 and ((bt * C) % 8 == 0 or bt * C == B * C):
            return bt
    return B  # full-array block: exempt from the 8-sublane divisibility rule


@jax.jit
def non_local_forward(x, g_w, g_b, theta_w, theta_b, phi_w, phi_b,
                      W_w, W_b, gamma, beta, run_mean, run_var):
    B, C, H, W = x.shape
    HW = H * W

    # Rank-1 attention collapse is only valid for inter_channels == 1 (which the
    # module guarantees: reduc_ratio // reduc_ratio == 1). Assert it explicitly.
    assert theta_w.shape == (1, C, 1, 1), theta_w.shape
    assert phi_w.shape == (1, C, 1, 1), phi_w.shape
    assert g_w.shape == (1, C, 1, 1), g_w.shape
    assert W_w.shape == (C, 1, 1, 1), W_w.shape

    # (B, C, H, W) -> (B*C, HW): contiguous reshape, no padding needed since the
    # block's last dim equals the full array dim.
    x_flat = x.reshape(B * C, HW).astype(jnp.float32)

    # Fold BatchNorm (inference running stats) into the W 1x1 conv and pack every
    # scalar parameter into one tiny SMEM array.
    # TODO(synk): training-mode (batch-statistics) BN is not modeled in-kernel.
    scale = gamma / jnp.sqrt(run_var + EPS)
    eff_w = W_w.reshape(C) * scale
    eff_b = (W_b - run_mean) * scale + beta
    params = jnp.concatenate([
        theta_w.reshape(C), phi_w.reshape(C), g_w.reshape(C),
        theta_b.reshape(1), phi_b.reshape(1), g_b.reshape(1),
        eff_w, eff_b,
    ]).astype(jnp.float32)                                        # (5C+3,)

    Bt = _pick_bt(B, C, HW)
    rows = Bt * C
    kernel = functools.partial(_non_local_kernel, C=C, Bt=Bt, hw=HW)

    z = pl.pallas_call(
        kernel,
        out_shape=jax.ShapeDtypeStruct((B * C, HW), jnp.float32),
        grid=(B // Bt,),
        in_specs=[
            pl.BlockSpec((rows, HW), lambda i: (i, 0)),
            pl.BlockSpec(memory_space=pltpu.MemorySpace.SMEM),
        ],
        out_specs=pl.BlockSpec((rows, HW), lambda i: (i, 0)),
        compiler_params=pltpu.CompilerParams(
            dimension_semantics=("parallel",)),
    )(x_flat, params)

    return z.reshape(B, C, H, W)


# -------------------------- pure-JAX reference (literal) --------------------------
def reference(x, g_w, g_b, theta_w, theta_b, phi_w, phi_b,
              W_w, W_b, gamma, beta, run_mean, run_var, eps=EPS):
    B, C, H, W = x.shape
    HW = H * W

    def conv1x1(inp, w, b):
        out = jax.lax.conv_general_dilated(
            inp, w, window_strides=(1, 1), padding='VALID',
            dimension_numbers=('NCHW', 'OIHW', 'NCHW'))
        return out + b[None, :, None, None]

    g_x = conv1x1(x, g_w, g_b).reshape(B, 1, HW).transpose(0, 2, 1)        # (B,HW,1)
    theta_x = conv1x1(x, theta_w, theta_b).reshape(B, 1, HW).transpose(0, 2, 1)
    phi_x = conv1x1(x, phi_w, phi_b).reshape(B, 1, HW)                      # (B,1,HW)

    f = jnp.matmul(theta_x, phi_x)                                          # (B,HW,HW)
    f_div_C = f / f.shape[-1]
    y = jnp.matmul(f_div_C, g_x)                                            # (B,HW,1)
    y = y.transpose(0, 2, 1).reshape(B, 1, H, W)

    W_y = conv1x1(y, W_w, W_b)
    scale = gamma / jnp.sqrt(run_var + eps)
    W_y = W_y * scale[None, :, None, None] + (beta - run_mean * scale)[None, :, None, None]
    return W_y + x


if __name__ == "__main__":
    key = jax.random.PRNGKey(0)
    ks = jax.random.split(key, 13)

    B, C, H, W = 2, 4, 16, 16            # in_channels=4, inter_channels=1
    x = jax.random.normal(ks[0], (B, C, H, W), jnp.float32)

    g_w = jax.random.normal(ks[1], (1, C, 1, 1), jnp.float32) * 0.2
    g_b = jax.random.normal(ks[2], (1,), jnp.float32) * 0.1
    theta_w = jax.random.normal(ks[3], (1, C, 1, 1), jnp.float32) * 0.2
    theta_b = jax.random.normal(ks[4], (1,), jnp.float32) * 0.1
    phi_w = jax.random.normal(ks[5], (1, C, 1, 1), jnp.float32) * 0.2
    phi_b = jax.random.normal(ks[6], (1,), jnp.float32) * 0.1
    W_w = jax.random.normal(ks[7], (C, 1, 1, 1), jnp.float32) * 0.2
    W_b = jax.random.normal(ks[8], (C,), jnp.float32) * 0.1
    # NB: the module initializes BN weight/bias to 0 (-> z == x at init); we test
    # with general nonzero BN params so the full path is exercised.
    gamma = jax.random.uniform(ks[9], (C,), jnp.float32, minval=0.5, maxval=1.5)
    beta = jax.random.normal(ks[10], (C,), jnp.float32) * 0.1
    run_mean = jax.random.normal(ks[11], (C,), jnp.float32) * 0.1
    run_var = jax.random.uniform(ks[12], (C,), jnp.float32, minval=0.5, maxval=1.5)

    out = non_local_forward(x, g_w, g_b, theta_w, theta_b, phi_w, phi_b,
                            W_w, W_b, gamma, beta, run_mean, run_var)
    out = jax.block_until_ready(out)

    ref = reference(x, g_w, g_b, theta_w, theta_b, phi_w, phi_b,
                    W_w, W_b, gamma, beta, run_mean, run_var)

    assert out.shape == (B, C, H, W), out.shape
    np.testing.assert_allclose(np.asarray(out), np.asarray(ref),
                               rtol=1e-4, atol=1e-4)
    print("KERNEL_OK")
</pallas_src>

<mosaic_0001>
module attributes {stable_mosaic.version = 11 : i64} {
  func.func @_non_local_kernel(%arg0: i32, %arg1: memref<8x256xf32, #tpu.memory_space<vmem>>, %arg2: memref<23xf32, #tpu.memory_space<smem>>, %arg3: memref<8x256xf32, #tpu.memory_space<vmem>>) attributes {dimension_semantics = [#tpu.dimension_semantics<parallel>], iteration_bounds = array<i64: 1>, scalar_prefetch = 0 : i64, scratch_operands = 0 : i64, tpu.core_type = #tpu.core_type<tc>, window_params = [{transform_indices = @transform_0, window_bounds = array<i64: 8, 256>}, {transform_indices = @transform_1, window_bounds = array<i64: 23>}, {transform_indices = @transform_2, window_bounds = array<i64: 8, 256>}]} {
    %c12 = arith.constant 12 : index
    %0 = memref.load %arg2[%c12] : memref<23xf32, #tpu.memory_space<smem>>
    %c13 = arith.constant 13 : index
    %1 = memref.load %arg2[%c13] : memref<23xf32, #tpu.memory_space<smem>>
    %c14 = arith.constant 14 : index
    %2 = memref.load %arg2[%c14] : memref<23xf32, #tpu.memory_space<smem>>
    %c0 = arith.constant 0 : index
    %c0_0 = arith.constant 0 : index
    %3 = vector.load %arg1[%c0, %c0_0] : memref<8x256xf32, #tpu.memory_space<vmem>>, vector<1x256xf32>
    %c1 = arith.constant 1 : index
    %c0_1 = arith.constant 0 : index
    %4 = vector.load %arg1[%c1, %c0_1] : memref<8x256xf32, #tpu.memory_space<vmem>>, vector<1x256xf32>
    %c2 = arith.constant 2 : index
    %c0_2 = arith.constant 0 : index
    %5 = vector.load %arg1[%c2, %c0_2] : memref<8x256xf32, #tpu.memory_space<vmem>>, vector<1x256xf32>
    %c3 = arith.constant 3 : index
    %c0_3 = arith.constant 0 : index
    %6 = vector.load %arg1[%c3, %c0_3] : memref<8x256xf32, #tpu.memory_space<vmem>>, vector<1x256xf32>
    %c0_4 = arith.constant 0 : index
    %7 = memref.load %arg2[%c0_4] : memref<23xf32, #tpu.memory_space<smem>>
    %8 = vector.broadcast %7 : f32 to vector<1x256xf32>
    %9 = arith.mulf %3, %8 : vector<1x256xf32>
    %c4 = arith.constant 4 : index
    %10 = memref.load %arg2[%c4] : memref<23xf32, #tpu.memory_space<smem>>
    %11 = vector.broadcast %10 : f32 to vector<1x256xf32>
    %12 = arith.mulf %3, %11 : vector<1x256xf32>
    %c8 = arith.constant 8 : index
    %13 = memref.load %arg2[%c8] : memref<23xf32, #tpu.memory_space<smem>>
    %14 = vector.broadcast %13 : f32 to vector<1x256xf32>
    %15 = arith.mulf %3, %14 : vector<1x256xf32>
    %c1_5 = arith.constant 1 : index
    %16 = memref.load %arg2[%c1_5] : memref<23xf32, #tpu.memory_space<smem>>
    %17 = vector.broadcast %16 : f32 to vector<1x256xf32>
    %18 = arith.mulf %4, %17 : vector<1x256xf32>
    %19 = arith.addf %9, %18 : vector<1x256xf32>
    %c5 = arith.constant 5 : index
    %20 = memref.load %arg2[%c5] : memref<23xf32, #tpu.memory_space<smem>>
    %21 = vector.broadcast %20 : f32 to vector<1x256xf32>
    %22 = arith.mulf %4, %21 : vector<1x256xf32>
    %23 = arith.addf %12, %22 : vector<1x256xf32>
    %c9 = arith.constant 9 : index
    %24 = memref.load %arg2[%c9] : memref<23xf32, #tpu.memory_space<smem>>
    %25 = vector.broadcast %24 : f32 to vector<1x256xf32>
    %26 = arith.mulf %4, %25 : vector<1x256xf32>
    %27 = arith.addf %15, %26 : vector<1x256xf32>
    %c2_6 = arith.constant 2 : index
    %28 = memref.load %arg2[%c2_6] : memref<23xf32, #tpu.memory_space<smem>>
    %29 = vector.broadcast %28 : f32 to vector<1x256xf32>
    %30 = arith.mulf %5, %29 : vector<1x256xf32>
    %31 = arith.addf %19, %30 : vector<1x256xf32>
    %c6 = arith.constant 6 : index
    %32 = memref.load %arg2[%c6] : memref<23xf32, #tpu.memory_space<smem>>
    %33 = vector.broadcast %32 : f32 to vector<1x256xf32>
    %34 = arith.mulf %5, %33 : vector<1x256xf32>
    %35 = arith.addf %23, %34 : vector<1x256xf32>
    %c10 = arith.constant 10 : index
    %36 = memref.load %arg2[%c10] : memref<23xf32, #tpu.memory_space<smem>>
    %37 = vector.broadcast %36 : f32 to vector<1x256xf32>
    %38 = arith.mulf %5, %37 : vector<1x256xf32>
    %39 = arith.addf %27, %38 : vector<1x256xf32>
    %c3_7 = arith.constant 3 : index
    %40 = memref.load %arg2[%c3_7] : memref<23xf32, #tpu.memory_space<smem>>
    %41 = vector.broadcast %40 : f32 to vector<1x256xf32>
    %42 = arith.mulf %6, %41 : vector<1x256xf32>
    %43 = arith.addf %31, %42 : vector<1x256xf32>
    %c7 = arith.constant 7 : index
    %44 = memref.load %arg2[%c7] : memref<23xf32, #tpu.memory_space<smem>>
    %45 = vector.broadcast %44 : f32 to vector<1x256xf32>
    %46 = arith.mulf %6, %45 : vector<1x256xf32>
    %47 = arith.addf %35, %46 : vector<1x256xf32>
    %c11 = arith.constant 11 : index
    %48 = memref.load %arg2[%c11] : memref<23xf32, #tpu.memory_space<smem>>
    %49 = vector.broadcast %48 : f32 to vector<1x256xf32>
    %50 = arith.mulf %6, %49 : vector<1x256xf32>
    %51 = arith.addf %39, %50 : vector<1x256xf32>
    %52 = vector.broadcast %0 : f32 to vector<1x256xf32>
    %53 = arith.addf %43, %52 : vector<1x256xf32>
    %54 = vector.broadcast %1 : f32 to vector<1x256xf32>
    %55 = arith.addf %47, %54 : vector<1x256xf32>
    %56 = vector.broadcast %2 : f32 to vector<1x256xf32>
    %57 = arith.addf %51, %56 : vector<1x256xf32>
    %58 = arith.mulf %55, %57 : vector<1x256xf32>
    %59 = vector.shape_cast %58 : vector<1x256xf32> to vector<1x1x256xf32>
    %cst = arith.constant dense<0.000000e+00> : vector<1xf32>
    %60 = vector.multi_reduction <add>, %59, %cst [1, 2] : vector<1x1x256xf32> to vector<1xf32>
    %61 = vector.shape_cast %60 : vector<1xf32> to vector<1x1x1xf32>
    %62 = vector.extract %61[0, 0, 0] : f32 from vector<1x1x1xf32>
    %cst_8 = arith.constant 3.906250e-03 : f32
    %63 = arith.mulf %62, %cst_8 : f32
    %64 = vector.broadcast %63 : f32 to vector<1x256xf32>
    %65 = arith.mulf %53, %64 : vector<1x256xf32>
    %c15 = arith.constant 15 : index
    %66 = memref.load %arg2[%c15] : memref<23xf32, #tpu.memory_space<smem>>
    %67 = vector.broadcast %66 : f32 to vector<1x256xf32>
    %68 = arith.mulf %67, %65 : vector<1x256xf32>
    %69 = arith.addf %3, %68 : vector<1x256xf32>
    %c19 = arith.constant 19 : index
    %70 = memref.load %arg2[%c19] : memref<23xf32, #tpu.memory_space<smem>>
    %71 = vector.broadcast %70 : f32 to vector<1x256xf32>
    %72 = arith.addf %69, %71 : vector<1x256xf32>
    %c0_9 = arith.constant 0 : index
    %c0_10 = arith.constant 0 : index
    %73 = vector.load %arg3[%c0_9, %c0_10] : memref<8x256xf32, #tpu.memory_space<vmem>>, vector<1x256xf32>
    tpu.vector_store %arg3[%c0_9, %c0_10], %72 {strides = array<i32>} : memref<8x256xf32, #tpu.memory_space<vmem>>, vector<1x256xf32>,
    %c16 = arith.constant 16 : index
    %74 = memref.load %arg2[%c16] : memref<23xf32, #tpu.memory_space<smem>>
    %75 = vector.broadcast %74 : f32 to vector<1x256xf32>
    %76 = arith.mulf %75, %65 : vector<1x256xf32>
    %77 = arith.addf %4, %76 : vector<1x256xf32>
    %c20 = arith.constant 20 : index
    %78 = memref.load %arg2[%c20] : memref<23xf32, #tpu.memory_space<smem>>
    %79 = vector.broadcast %78 : f32 to vector<1x256xf32>
    %80 = arith.addf %77, %79 : vector<1x256xf32>
    %c1_11 = arith.constant 1 : index
    %c0_12 = arith.constant 0 : index
    %81 = vector.load %arg3[%c1_11, %c0_12] : memref<8x256xf32, #tpu.memory_space<vmem>>, vector<1x256xf32>
    tpu.vector_store %arg3[%c1_11, %c0_12], %80 {strides = array<i32>} : memref<8x256xf32, #tpu.memory_space<vmem>>, vector<1x256xf32>,
    %c17 = arith.constant 17 : index
    %82 = memref.load %arg2[%c17] : memref<23xf32, #tpu.memory_space<smem>>
    %83 = vector.broadcast %82 : f32 to vector<1x256xf32>
    %84 = arith.mulf %83, %65 : vector<1x256xf32>
    %85 = arith.addf %5, %84 : vector<1x256xf32>
    %c21 = arith.constant 21 : index
    %86 = memref.load %arg2[%c21] : memref<23xf32, #tpu.memory_space<smem>>
    %87 = vector.broadcast %86 : f32 to vector<1x256xf32>
    %88 = arith.addf %85, %87 : vector<1x256xf32>
    %c2_13 = arith.constant 2 : index
    %c0_14 = arith.constant 0 : index
    %89 = vector.load %arg3[%c2_13, %c0_14] : memref<8x256xf32, #tpu.memory_space<vmem>>, vector<1x256xf32>
    tpu.vector_store %arg3[%c2_13, %c0_14], %88 {strides = array<i32>} : memref<8x256xf32, #tpu.memory_space<vmem>>, vector<1x256xf32>,
    %c18 = arith.constant 18 : index
    %90 = memref.load %arg2[%c18] : memref<23xf32, #tpu.memory_space<smem>>
    %91 = vector.broadcast %90 : f32 to vector<1x256xf32>
    %92 = arith.mulf %91, %65 : vector<1x256xf32>
    %93 = arith.addf %6, %92 : vector<1x256xf32>
    %c22 = arith.constant 22 : index
    %94 = memref.load %arg2[%c22] : memref<23xf32, #tpu.memory_space<smem>>
    %95 = vector.broadcast %94 : f32 to vector<1x256xf32>
    %96 = arith.addf %93, %95 : vector<1x256xf32>
    %c3_15 = arith.constant 3 : index
    %c0_16 = arith.constant 0 : index
    %97 = vector.load %arg3[%c3_15, %c0_16] : memref<8x256xf32, #tpu.memory_space<vmem>>, vector<1x256xf32>
    tpu.vector_store %arg3[%c3_15, %c0_16], %96 {strides = array<i32>} : memref<8x256xf32, #tpu.memory_space<vmem>>, vector<1x256xf32>,
    %c4_17 = arith.constant 4 : index
    %c0_18 = arith.constant 0 : index
    %98 = vector.load %arg1[%c4_17, %c0_18] : memref<8x256xf32, #tpu.memory_space<vmem>>, vector<1x256xf32>
    %c5_19 = arith.constant 5 : index
    %c0_20 = arith.constant 0 : index
    %99 = vector.load %arg1[%c5_19, %c0_20] : memref<8x256xf32, #tpu.memory_space<vmem>>, vector<1x256xf32>
    %c6_21 = arith.constant 6 : index
    %c0_22 = arith.constant 0 : index
    %100 = vector.load %arg1[%c6_21, %c0_22] : memref<8x256xf32, #tpu.memory_space<vmem>>, vector<1x256xf32>
    %c7_23 = arith.constant 7 : index
    %c0_24 = arith.constant 0 : index
    %101 = vector.load %arg1[%c7_23, %c0_24] : memref<8x256xf32, #tpu.memory_space<vmem>>, vector<1x256xf32>
    %c0_25 = arith.constant 0 : index
    %102 = memref.load %arg2[%c0_25] : memref<23xf32, #tpu.memory_space<smem>>
    %103 = vector.broadcast %102 : f32 to vector<1x256xf32>
    %104 = arith.mulf %98, %103 : vector<1x256xf32>
    %c4_26 = arith.constant 4 : index
    %105 = memref.load %arg2[%c4_26] : memref<23xf32, #tpu.memory_space<smem>>
    %106 = vector.broadcast %105 : f32 to vector<1x256xf32>
    %107 = arith.mulf %98, %106 : vector<1x256xf32>
    %c8_27 = arith.constant 8 : index
    %108 = memref.load %arg2[%c8_27] : memref<23xf32, #tpu.memory_space<smem>>
    %109 = vector.broadcast %108 : f32 to vector<1x256xf32>
    %110 = arith.mulf %98, %109 : vector<1x256xf32>
    %c1_28 = arith.constant 1 : index
    %111 = memref.load %arg2[%c1_28] : memref<23xf32, #tpu.memory_space<smem>>
    %112 = vector.broadcast %111 : f32 to vector<1x256xf32>
    %113 = arith.mulf %99, %112 : vector<1x256xf32>
    %114 = arith.addf %104, %113 : vector<1x256xf32>
    %c5_29 = arith.constant 5 : index
    %115 = memref.load %arg2[%c5_29] : memref<23xf32, #tpu.memory_space<smem>>
    %116 = vector.broadcast %115 : f32 to vector<1x256xf32>
    %117 = arith.mulf %99, %116 : vector<1x256xf32>
    %118 = arith.addf %107, %117 : vector<1x256xf32>
    %c9_30 = arith.constant 9 : index
    %119 = memref.load %arg2[%c9_30] : memref<23xf32, #tpu.memory_space<smem>>
    %120 = vector.broadcast %119 : f32 to vector<1x256xf32>
    %121 = arith.mulf %99, %120 : vector<1x256xf32>
    %122 = arith.addf %110, %121 : vector<1x256xf32>
    %c2_31 = arith.constant 2 : index
    %123 = memref.load %arg2[%c2_31] : memref<23xf32, #tpu.memory_space<smem>>
    %124 = vector.broadcast %123 : f32 to vector<1x256xf32>
    %125 = arith.mulf %100, %124 : vector<1x256xf32>
    %126 = arith.addf %114, %125 : vector<1x256xf32>
    %c6_32 = arith.constant 6 : index
    %127 = memref.load %arg2[%c6_32] : memref<23xf32, #tpu.memory_space<smem>>
    %128 = vector.broadcast %127 : f32 to vector<1x256xf32>
    %129 = arith.mulf %100, %128 : vector<1x256xf32>
    %130 = arith.addf %118, %129 : vector<1x256xf32>
    %c10_33 = arith.constant 10 : index
    %131 = memref.load %arg2[%c10_33] : memref<23xf32, #tpu.memory_space<smem>>
    %132 = vector.broadcast %131 : f32 to vector<1x256xf32>
    %133 = arith.mulf %100, %132 : vector<1x256xf32>
    %134 = arith.addf %122, %133 : vector<1x256xf32>
    %c3_34 = arith.constant 3 : index
    %135 = memref.load %arg2[%c3_34] : memref<23xf32, #tpu.memory_space<smem>>
    %136 = vector.broadcast %135 : f32 to vector<1x256xf32>
    %137 = arith.mulf %101, %136 : vector<1x256xf32>
    %138 = arith.addf %126, %137 : vector<1x256xf32>
    %c7_35 = arith.constant 7 : index
    %139 = memref.load %arg2[%c7_35] : memref<23xf32, #tpu.memory_space<smem>>
    %140 = vector.broadcast %139 : f32 to vector<1x256xf32>
    %141 = arith.mulf %101, %140 : vector<1x256xf32>
    %142 = arith.addf %130, %141 : vector<1x256xf32>
    %c11_36 = arith.constant 11 : index
    %143 = memref.load %arg2[%c11_36] : memref<23xf32, #tpu.memory_space<smem>>
    %144 = vector.broadcast %143 : f32 to vector<1x256xf32>
    %145 = arith.mulf %101, %144 : vector<1x256xf32>
    %146 = arith.addf %134, %145 : vector<1x256xf32>
    %147 = vector.broadcast %0 : f32 to vector<1x256xf32>
    %148 = arith.addf %138, %147 : vector<1x256xf32>
    %149 = vector.broadcast %1 : f32 to vector<1x256xf32>
    %150 = arith.addf %142, %149 : vector<1x256xf32>
    %151 = vector.broadcast %2 : f32 to vector<1x256xf32>
    %152 = arith.addf %146, %151 : vector<1x256xf32>
    %153 = arith.mulf %150, %152 : vector<1x256xf32>
    %154 = vector.shape_cast %153 : vector<1x256xf32> to vector<1x1x256xf32>
    %cst_37 = arith.constant dense<0.000000e+00> : vector<1xf32>
    %155 = vector.multi_reduction <add>, %154, %cst_37 [1, 2] : vector<1x1x256xf32> to vector<1xf32>
    %156 = vector.shape_cast %155 : vector<1xf32> to vector<1x1x1xf32>
    %157 = vector.extract %156[0, 0, 0] : f32 from vector<1x1x1xf32>
    %cst_38 = arith.constant 3.906250e-03 : f32
    %158 = arith.mulf %157, %cst_38 : f32
    %159 = vector.broadcast %158 : f32 to vector<1x256xf32>
    %160 = arith.mulf %148, %159 : vector<1x256xf32>
    %c15_39 = arith.constant 15 : index
    %161 = memref.load %arg2[%c15_39] : memref<23xf32, #tpu.memory_space<smem>>
    %162 = vector.broadcast %161 : f32 to vector<1x256xf32>
    %163 = arith.mulf %162, %160 : vector<1x256xf32>
    %164 = arith.addf %98, %163 : vector<1x256xf32>
    %c19_40 = arith.constant 19 : index
    %165 = memref.load %arg2[%c19_40] : memref<23xf32, #tpu.memory_space<smem>>
    %166 = vector.broadcast %165 : f32 to vector<1x256xf32>
    %167 = arith.addf %164, %166 : vector<1x256xf32>
    %c4_41 = arith.constant 4 : index
    %c0_42 = arith.constant 0 : index
    %168 = vector.load %arg3[%c4_41, %c0_42] : memref<8x256xf32, #tpu.memory_space<vmem>>, vector<1x256xf32>
    tpu.vector_store %arg3[%c4_41, %c0_42], %167 {strides = array<i32>} : memref<8x256xf32, #tpu.memory_space<vmem>>, vector<1x256xf32>,
    %c16_43 = arith.constant 16 : index
    %169 = memref.load %arg2[%c16_43] : memref<23xf32, #tpu.memory_space<smem>>
    %170 = vector.broadcast %169 : f32 to vector<1x256xf32>
    %171 = arith.mulf %170, %160 : vector<1x256xf32>
    %172 = arith.addf %99, %171 : vector<1x256xf32>
    %c20_44 = arith.constant 20 : index
    %173 = memref.load %arg2[%c20_44] : memref<23xf32, #tpu.memory_space<smem>>
    %174 = vector.broadcast %173 : f32 to vector<1x256xf32>
    %175 = arith.addf %172, %174 : vector<1x256xf32>
    %c5_45 = arith.constant 5 : index
    %c0_46 = arith.constant 0 : index
    %176 = vector.load %arg3[%c5_45, %c0_46] : memref<8x256xf32, #tpu.memory_space<vmem>>, vector<1x256xf32>
    tpu.vector_store %arg3[%c5_45, %c0_46], %175 {strides = array<i32>} : memref<8x256xf32, #tpu.memory_space<vmem>>, vector<1x256xf32>,
    %c17_47 = arith.constant 17 : index
    %177 = memref.load %arg2[%c17_47] : memref<23xf32, #tpu.memory_space<smem>>
    %178 = vector.broadcast %177 : f32 to vector<1x256xf32>
    %179 = arith.mulf %178, %160 : vector<1x256xf32>
    %180 = arith.addf %100, %179 : vector<1x256xf32>
    %c21_48 = arith.constant 21 : index
    %181 = memref.load %arg2[%c21_48] : memref<23xf32, #tpu.memory_space<smem>>
    %182 = vector.broadcast %181 : f32 to vector<1x256xf32>
    %183 = arith.addf %180, %182 : vector<1x256xf32>
    %c6_49 = arith.constant 6 : index
    %c0_50 = arith.constant 0 : index
    %184 = vector.load %arg3[%c6_49, %c0_50] : memref<8x256xf32, #tpu.memory_space<vmem>>, vector<1x256xf32>
    tpu.vector_store %arg3[%c6_49, %c0_50], %183 {strides = array<i32>} : memref<8x256xf32, #tpu.memory_space<vmem>>, vector<1x256xf32>,
    %c18_51 = arith.constant 18 : index
    %185 = memref.load %arg2[%c18_51] : memref<23xf32, #tpu.memory_space<smem>>
    %186 = vector.broadcast %185 : f32 to vector<1x256xf32>
    %187 = arith.mulf %186, %160 : vector<1x256xf32>
    %188 = arith.addf %101, %187 : vector<1x256xf32>
    %c22_52 = arith.constant 22 : index
    %189 = memref.load %arg2[%c22_52] : memref<23xf32, #tpu.memory_space<smem>>
    %190 = vector.broadcast %189 : f32 to vector<1x256xf32>
    %191 = arith.addf %188, %190 : vector<1x256xf32>
    %c7_53 = arith.constant 7 : index
    %c0_54 = arith.constant 0 : index
    %192 = vector.load %arg3[%c7_53, %c0_54] : memref<8x256xf32, #tpu.memory_space<vmem>>, vector<1x256xf32>
    tpu.vector_store %arg3[%c7_53, %c0_54], %191 {strides = array<i32>} : memref<8x256xf32, #tpu.memory_space<vmem>>, vector<1x256xf32>,
    return
  }
  func.func @transform_0(%arg0: i32) -> (i32, i32) {
    %c0_i32 = arith.constant 0 : i32
    %c0_i32_0 = arith.constant 0 : i32
    return %arg0, %c0_i32 : i32, i32
  }
  func.func @transform_1(%arg0: i32) -> i32 {
    %c0_i32 = arith.constant 0 : i32
    %c0_i32_0 = arith.constant 0 : i32
    return %c0_i32 : i32
  }
  func.func @transform_2(%arg0: i32) -> (i32, i32) {
    %c0_i32 = arith.constant 0 : i32
    %c0_i32_0 = arith.constant 0 : i32
    return %arg0, %c0_i32 : i32, i32
  }
}

</mosaic_0001>

<llo_original>
// kernel: non_local_forward.1
$region0: #{non_local_forward.1}
  #allocation0 [shape = 'u32[]', space=smem, size = 0x4, offset = 0x4, fixed_abs, tag = 'smem constant byte address 0x4 - core index']
  #allocation1 [shape = 'u32[144,128]{1,0:T(1,128)}', space=vmem, size = 0x12000, scoped, tag = 'internal scratch']
  %s0 = inlined_call_operand.vmem [shape: f32[8,256], index: 0, kind: input, shape index: {}]
  %s1 = inlined_call_operand.vmem [shape: f32[23], index: 1, kind: input, shape index: {}]
  %s2 = inlined_call_operand.vmem [shape: f32[8,256], index: 2, kind: output, shape index: {}]
  %s3 = sld [smem:[#allocation0]]
  $region22: #{non_local_forward.1} parent=0
    _
  %s5 = ssub.s32 1, %s3
  %s6 = scalar_select 0, %s5, %s3
  $region1: #{non_local_forward.1} parent=0
    #allocation2 [shape = 'u8[512]{0}', space=smem, size = 0x200, scoped, tag = 'input window, operand 1, single buffered']
    #allocation3 [shape = 's32[1]{0}', space=sflag, size = 0x4, scoped, tag = 'scoped memory for non_local_forward.1']
    %7 = vsyncpa [#allocation3], 0
    // Predicated region
    $region2: #{non_local_forward.1} parent=1 // pred_check
      _
    $region3: #{non_local_forward.1} parent=1 // pred_check_branch
      %9 = sbr.rel (0) target = $region5
    $region4: #{non_local_forward.1} parent=1 // pred_region
      _
    $region5: #{non_local_forward.1} parent=1 // pred_fallthru
      _
    // Predicated region
    $region6: #{non_local_forward.1} parent=1 // pred_check
      _
    $region7: #{non_local_forward.1} parent=1 // pred_check_branch
      %11 = sbr.rel (0) target = $region9
    $region8: #{non_local_forward.1} parent=1 // pred_region
      %s13 = ssub.s32 16, 16
      %14 = vsyncadd [#allocation3], %s13
      %s16 = sshll.u32 %s1, 4
      %s17 = int_to_ptr.vmem [resolvable:$true] %s16
      %19 = dma.vmem_to_smem %s17, 16, [#allocation2], [#allocation3]
    $region9: #{non_local_forward.1} parent=1 // pred_fallthru
      _
    // Predicated region
    $region10: #{non_local_forward.1} parent=1 // pred_check
      _
    $region11: #{non_local_forward.1} parent=1 // pred_check_branch
      %21 = sbr.rel (0) target = $region13
    $region12: #{non_local_forward.1} parent=1 // pred_region
      %22 = dma.done [#allocation3], 16
    $region13: #{non_local_forward.1} parent=1 // pred_fallthru
      _
    %23 = sfence
    %s24 = sld [smem:[#allocation2 + $0xc]]
    %s25 = sld [smem:[#allocation2 + $0xd]]
    %s26 = sld [smem:[#allocation2 + $0xe]]
    %v27 = vld [vmem:[%s0] ss:$8 sm:$0x3]
    %s28 = scalar_lea.vmem %s0, 1
    %v29 = vld [vmem:[%s28] ss:$8 sm:$0x3]
    %s30 = scalar_lea.vmem %s0, 2
    %v31 = vld [vmem:[%s30] ss:$8 sm:$0x3]
    %s32 = scalar_lea.vmem %s0, 3
    %v33 = vld [vmem:[%s32] ss:$8 sm:$0x3]
    %s34 = sld [smem:[#allocation2]]
    %v35 = vstv %s34
    %v36 = vmul.f32 %v27, %v35
    %s37 = sld [smem:[#allocation2 + $0x4]]
    %v38 = vstv %s37
    %v39 = vmul.f32 %v27, %v38
    %s40 = sld [smem:[#allocation2 + $0x8]]
    %v41 = vstv %s40
    %v42 = vmul.f32 %v27, %v41
    %s43 = sld [smem:[#allocation2 + $0x1]]
    %v44 = vstv %s43
    %v45 = vmul.f32 %v29, %v44
    %v46 = vadd.f32 %v36, %v45
    %s47 = sld [smem:[#allocation2 + $0x5]]
    %v48 = vstv %s47
    %v49 = vmul.f32 %v29, %v48
    %v50 = vadd.f32 %v39, %v49
    %s51 = sld [smem:[#allocation2 + $0x9]]
    %v52 = vstv %s51
    %v53 = vmul.f32 %v29, %v52
    %v54 = vadd.f32 %v42, %v53
    %s55 = sld [smem:[#allocation2 + $0x2]]
    %v56 = vstv %s55
    %v57 = vmul.f32 %v31, %v56
    %v58 = vadd.f32 %v46, %v57
    %s59 = sld [smem:[#allocation2 + $0x6]]
    %v60 = vstv %s59
    %v61 = vmul.f32 %v31, %v60
    %v62 = vadd.f32 %v50, %v61
    %s63 = sld [smem:[#allocation2 + $0xa]]
    %v64 = vstv %s63
    %v65 = vmul.f32 %v31, %v64
    %v66 = vadd.f32 %v54, %v65
    %s67 = sld [smem:[#allocation2 + $0x3]]
    %v68 = vstv %s67
    %v69 = vmul.f32 %v33, %v68
    %v70 = vadd.f32 %v58, %v69
    %s71 = sld [smem:[#allocation2 + $0x7]]
    %v72 = vstv %s71
    %v73 = vmul.f32 %v33, %v72
    %v74 = vadd.f32 %v62, %v73
    %s75 = sld [smem:[#allocation2 + $0xb]]
    %v76 = vstv %s75
    %v77 = vmul.f32 %v33, %v76
    %v78 = vadd.f32 %v66, %v77
    %v79 = vstv %s24
    %v80 = vadd.f32 %v70, %v79
    %v81 = vstv %s25
    %v82 = vadd.f32 %v74, %v81
    %v83 = vstv %s26
    %v84 = vadd.f32 %v78, %v83
    %v85 = vmul.f32 %v82, %v84
    %v87 = vlaneseq
    %v88 = vshrl.u32 %v87, 7
    %v89 = vsub.s32 0, %v88
    %v90 = vrot.slane %v85, %v89
    %v91 = vlaneseq
    %v92 = vshrl.u32 %v91, 7
    %v93 = vsub.s32 1, %v92
    %v94 = vrot.slane %v85, %v93
    %vm97 = vcmask 1040384
    %v98 = vsel %vm97, %v90, 0.0
    %v99 = vsel %vm97, %v94, 0.0
    %v100 = vadd.f32 %v98, %v99
    %101 = vadd.xlane.f32.xlu0 %v100
    %v102 = vpop.xlane.xlu0 %101
    %v103 = vrot.slane %v102, 4
    %v104 = vadd.f32 %v102, %v103
    %v105 = vrot.slane %v104, 2
    %v106 = vadd.f32 %v104, %v105
    %v107 = vrot.slane %v106, 1
    %v108 = vadd.f32 %v106, %v107
    %s109 = vtos %v108
    %s110 = smul.f32 %s109, 0.00390625
    %v111 = vstv %s110
    %v112 = vmul.f32 %v80, %v111
    %s113 = sld [smem:[#allocation2 + $0xf]]
    %v114 = vstv %s113
    %v115 = vmul.f32 %v114, %v112
    %v116 = vadd.f32 %v27, %v115
    %s117 = sld [smem:[#allocation2 + $0x13]]
    %v118 = vstv %s117
    %v119 = vadd.f32 %v116, %v118
    %v120 = vlaneseq
    %vm121 = vcmp.ge.s32.totalorder %v120, 0
    %vm122 = vcmp.lt.s32.totalorder %v120, 256
    %vm123 = vmand %vm121, %vm122
    %124 = vst.msk [vmem:[%s2] ss:$8 sm:$0x3] %vm123, %v119
    %125 = vst.msk [vmem:[%s2] ss:$8 sm:$0x0] %vm123, %v119
    %s126 = sld [smem:[#allocation2 + $0x10]]
    %v127 = vstv %s126
    %v128 = vmul.f32 %v127, %v112
    %v129 = vadd.f32 %v29, %v128
    %s130 = sld [smem:[#allocation2 + $0x14]]
    %v131 = vstv %s130
    %v132 = vadd.f32 %v129, %v131
    %s133 = scalar_lea.vmem %s2, 1
    %134 = vst.msk [vmem:[%s133] ss:$8 sm:$0x3] %vm123, %v132
    %135 = vst.msk [vmem:[%s133] ss:$8 sm:$0x0] %vm123, %v132
    %s136 = sld [smem:[#allocation2 + $0x11]]
    %v137 = vstv %s136
    %v138 = vmul.f32 %v137, %v112
    %v139 = vadd.f32 %v31, %v138
    %s140 = sld [smem:[#allocation2 + $0x15]]
    %v141 = vstv %s140
    %v142 = vadd.f32 %v139, %v141
    %s143 = scalar_lea.vmem %s2, 2
    %144 = vst.msk [vmem:[%s143] ss:$8 sm:$0x3] %vm123, %v142
    %145 = vst.msk [vmem:[%s143] ss:$8 sm:$0x0] %vm123, %v142
    %s146 = sld [smem:[#allocation2 + $0x12]]
    %v147 = vstv %s146
    %v148 = vmul.f32 %v147, %v112
    %v149 = vadd.f32 %v33, %v148
    %s150 = sld [smem:[#allocation2 + $0x16]]
    %v151 = vstv %s150
    %v152 = vadd.f32 %v149, %v151
    %s153 = scalar_lea.vmem %s2, 3
    %154 = vst.msk [vmem:[%s153] ss:$8 sm:$0x3] %vm123, %v152
    %155 = vst.msk [vmem:[%s153] ss:$8 sm:$0x0] %vm123, %v152
    %s156 = scalar_lea.vmem %s0, 4
    %v157 = vld [vmem:[%s156] ss:$8 sm:$0x3]
    %s158 = scalar_lea.vmem %s0, 5
    %v159 = vld [vmem:[%s158] ss:$8 sm:$0x3]
    %s160 = scalar_lea.vmem %s0, 6
    %v161 = vld [vmem:[%s160] ss:$8 sm:$0x3]
    %s162 = scalar_lea.vmem %s0, 7
    %v163 = vld [vmem:[%s162] ss:$8 sm:$0x3]
    %s164 = sld [smem:[#allocation2]]
    %v165 = vstv %s164
    %v166 = vmul.f32 %v157, %v165
    %s167 = sld [smem:[#allocation2 + $0x4]]
    %v168 = vstv %s167
    %v169 = vmul.f32 %v157, %v168
    %s170 = sld [smem:[#allocation2 + $0x8]]
    %v171 = vstv %s170
    %v172 = vmul.f32 %v157, %v171
    %s173 = sld [smem:[#allocation2 + $0x1]]
    %v174 = vstv %s173
    %v175 = vmul.f32 %v159, %v174
    %v176 = vadd.f32 %v166, %v175
    %s177 = sld [smem:[#allocation2 + $0x5]]
    %v178 = vstv %s177
    %v179 = vmul.f32 %v159, %v178
    %v180 = vadd.f32 %v169, %v179
    %s181 = sld [smem:[#allocation2 + $0x9]]
    %v182 = vstv %s181
    %v183 = vmul.f32 %v159, %v182
    %v184 = vadd.f32 %v172, %v183
    %s185 = sld [smem:[#allocation2 + $0x2]]
    %v186 = vstv %s185
    %v187 = vmul.f32 %v161, %v186
    %v188 = vadd.f32 %v176, %v187
    %s189 = sld [smem:[#allocation2 + $0x6]]
    %v190 = vstv %s189
    %v191 = vmul.f32 %v161, %v190
    %v192 = vadd.f32 %v180, %v191
    %s193 = sld [smem:[#allocation2 + $0xa]]
    %v194 = vstv %s193
    %v195 = vmul.f32 %v161, %v194
    %v196 = vadd.f32 %v184, %v195
    %s197 = sld [smem:[#allocation2 + $0x3]]
    %v198 = vstv %s197
    %v199 = vmul.f32 %v163, %v198
    %v200 = vadd.f32 %v188, %v199
    %s201 = sld [smem:[#allocation2 + $0x7]]
    %v202 = vstv %s201
    %v203 = vmul.f32 %v163, %v202
    %v204 = vadd.f32 %v192, %v203
    %s205 = sld [smem:[#allocation2 + $0xb]]
    %v206 = vstv %s205
    %v207 = vmul.f32 %v163, %v206
    %v208 = vadd.f32 %v196, %v207
    %v209 = vadd.f32 %v200, %v79
    %v210 = vadd.f32 %v204, %v81
    %v211 = vadd.f32 %v208, %v83
    %v212 = vmul.f32 %v210, %v211
    %v214 = vlaneseq
    %v215 = vshrl.u32 %v214, 7
    %v216 = vsub.s32 0, %v215
    %v217 = vrot.slane %v212, %v216
    %v218 = vlaneseq
    %v219 = vshrl.u32 %v218, 7
    %v220 = vsub.s32 1, %v219
    %v221 = vrot.slane %v212, %v220
    %v224 = vsel %vm97, %v217, 0.0
    %v225 = vsel %vm97, %v221, 0.0
    %v226 = vadd.f32 %v224, %v225
    %227 = vadd.xlane.f32.xlu0 %v226
    %v228 = vpop.xlane.xlu0 %227
    %v229 = vrot.slane %v228, 4
    %v230 = vadd.f32 %v228, %v229
    %v231 = vrot.slane %v230, 2
    %v232 = vadd.f32 %v230, %v231
    %v233 = vrot.slane %v232, 1
    %v234 = vadd.f32 %v232, %v233
    %s235 = vtos %v234
    %s236 = smul.f32 %s235, 0.00390625
    %v237 = vstv %s236
    %v238 = vmul.f32 %v209, %v237
    %s239 = sld [smem:[#allocation2 + $0xf]]
    %v240 = vstv %s239
    %v241 = vmul.f32 %v240, %v238
    %v242 = vadd.f32 %v157, %v241
    %s243 = sld [smem:[#allocation2 + $0x13]]
    %v244 = vstv %s243
    %v245 = vadd.f32 %v242, %v244
    %s246 = scalar_lea.vmem %s2, 4
    %247 = vst.msk [vmem:[%s246] ss:$8 sm:$0x3] %vm123, %v245
    %248 = vst.msk [vmem:[%s246] ss:$8 sm:$0x0] %vm123, %v245
    %s249 = sld [smem:[#allocation2 + $0x10]]
    %v250 = vstv %s249
    %v251 = vmul.f32 %v250, %v238
    %v252 = vadd.f32 %v159, %v251
    %s253 = sld [smem:[#allocation2 + $0x14]]
    %v254 = vstv %s253
    %v255 = vadd.f32 %v252, %v254
    %s256 = scalar_lea.vmem %s2, 5
    %257 = vst.msk [vmem:[%s256] ss:$8 sm:$0x3] %vm123, %v255
    %258 = vst.msk [vmem:[%s256] ss:$8 sm:$0x0] %vm123, %v255
    %s259 = sld [smem:[#allocation2 + $0x11]]
    %v260 = vstv %s259
    %v261 = vmul.f32 %v260, %v238
    %v262 = vadd.f32 %v161, %v261
    %s263 = sld [smem:[#allocation2 + $0x15]]
    %v264 = vstv %s263
    %v265 = vadd.f32 %v262, %v264
    %s266 = scalar_lea.vmem %s2, 6
    %267 = vst.msk [vmem:[%s266] ss:$8 sm:$0x3] %vm123, %v265
    %268 = vst.msk [vmem:[%s266] ss:$8 sm:$0x0] %vm123, %v265
    %s269 = sld [smem:[#allocation2 + $0x12]]
    %v270 = vstv %s269
    %v271 = vmul.f32 %v270, %v238
    %v272 = vadd.f32 %v163, %v271
    %s273 = sld [smem:[#allocation2 + $0x16]]
    %v274 = vstv %s273
    %v275 = vadd.f32 %v272, %v274
    %s276 = scalar_lea.vmem %s2, 7
    %277 = vst.msk [vmem:[%s276] ss:$8 sm:$0x3] %vm123, %v275
    %278 = vst.msk [vmem:[%s276] ss:$8 sm:$0x0] %vm123, %v275
    // Predicated region
    $region14: #{non_local_forward.1} parent=1 // pred_check
      _
    $region15: #{non_local_forward.1} parent=1 // pred_check_branch
      %280 = sbr.rel (0) target = $region17
    $region16: #{non_local_forward.1} parent=1 // pred_region
      _
    $region17: #{non_local_forward.1} parent=1 // pred_fallthru
      _
    // Predicated region
    $region18: #{non_local_forward.1} parent=1 // pred_check
      _
    $region19: #{non_local_forward.1} parent=1 // pred_check_branch
      %282 = sbr.rel (0) target = $region21
    $region20: #{non_local_forward.1} parent=1 // pred_region
      _
    $region21: #{non_local_forward.1} parent=1 // pred_fallthru
      _
    %283 = vsyncpa [#allocation3], 1

</llo_original>
